<compile_context>
chip_gen: v7x
topology: tpu7x:2x2x1
jax: 0.10.0
libtpu: 0.0.40
codegen_flags: <defaults>
</compile_context>

<pallas_src>
import functools

import jax
import jax.numpy as jnp
from jax.experimental import pallas as pl
from jax.experimental.pallas import tpu as pltpu

SHAPES = ((4, 16, 16), (128,))
N1 = 4 * 16 * 16          # 1024
N2 = 128
N = N1 + N2               # 1152

LANES = 128
ROWS1 = N1 // LANES       # 8  -> one full (8,128) f32 vreg per evaluation
MAX_TILE_B = 128          # batch-tile upper bound (MXU M target)


def _round_up(x, m):
    return (x + m - 1) // m * m


def prepare_params(w1, a2, b2, weights_dtype=jnp.bfloat16):
    """One-time (solver-setup) parameter preparation.

    - A2 is transposed ONCE here; the kernel then contracts ((1,),(0,)) with
      no per-call transpose anywhere on the hot path.
    - W1 / A2 are stored in bf16 to halve their HBM footprint / DMA; the
      kernel upcasts to f32 before the math (safe on v5e, tolerance-safe).
    """
    w1_2d = jnp.asarray(w1, jnp.float32).reshape(ROWS1, LANES).astype(weights_dtype)
    a2_t = jnp.asarray(a2, jnp.float32).T.astype(weights_dtype)     # (128,128) = A2^T
    b2_2d = jnp.asarray(b2, jnp.float32).reshape(1, LANES)
    return w1_2d, a2_t, b2_2d


def _tuple_func_kernel(t1_ref, t2_ref, y1_ref, y2_ref, w1_ref, a2t_ref, b2_ref,
                       o1_ref, o2_ref):
    # t1_ref:  (TB, 1, 1)   f32   per-evaluation time (for component 0 broadcast)
    # t2_ref:  (TB, 1)      f32   per-evaluation time (for component 1 broadcast)
    # y1_ref:  (TB, 8, 128) f32   component 0, lane-dense
    # y2_ref:  (TB, 128)    f32   component 1
    # w1_ref:  (8, 128)     bf16  VMEM-resident across the whole grid
    # a2t_ref: (128, 128)   bf16  A2^T (pre-transposed once at setup), resident
    # b2_ref:  (1, 128)     f32   resident
    # o1_ref:  (TB, 8, 128) f32
    # o2_ref:  (TB, 128)    f32

    # --- component 0: elementwise dynamics (VPU + EUP), full-vreg tiles ---
    w1 = w1_ref[...].astype(jnp.float32)                       # (8, 128)
    o1_ref[...] = jnp.tanh(y1_ref[...] * w1 + t1_ref[...])

    # --- component 1: batched matvec on the MXU, f32 accumulation ---
    a2t = a2t_ref[...].astype(jnp.float32)                     # (128, 128)
    f2 = jnp.dot(y2_ref[...], a2t, preferred_element_type=jnp.float32)  # (TB,128)
    o2_ref[...] = jnp.tanh(f2 + t2_ref[...] * b2_ref[...])


@jax.jit
def tuple_func_forward_batch(ts, ys, w1_2d, a2_t, b2_2d):
    """Evaluate _TupleFunc.forward for B independent (t, y) pairs in ONE
    pallas_call.  ys: (B, N) flat states; ts: scalar or (B,) times."""
    ys = jnp.asarray(ys, jnp.float32)
    B = ys.shape[0]
    ts = jnp.broadcast_to(jnp.asarray(ts, jnp.float32).reshape(-1), (B,))

    # Batch tiling: keep second-to-last block dims multiples of 8.
    pad_b = _round_up(B, 8)
    tb = min(pad_b, MAX_TILE_B)
    pad_b = _round_up(pad_b, tb)
    n_tiles = pad_b // tb

    yp = jnp.zeros((pad_b, N), jnp.float32).at[:B].set(ys)
    tp = jnp.zeros((pad_b,), jnp.float32).at[:B].set(ts)

    # Wrapper-side layout plumbing: lane-dense slabs per component.
    y1 = yp[:, :N1].reshape(pad_b, ROWS1, LANES)
    y2 = yp[:, N1:]
    t1 = tp.reshape(pad_b, 1, 1)
    t2 = tp.reshape(pad_b, 1)

    cost = pl.CostEstimate(
        flops=pad_b * (2 * N1 + 2 * N2 * N2 + 2 * N2),
        transcendentals=pad_b * N,
        bytes_accessed=pad_b * (2 * N * 4 + 8)
        + (ROWS1 * LANES + N2 * N2) * 2 + N2 * 4,
    )

    o1, o2 = pl.pallas_call(
        _tuple_func_kernel,
        out_shape=(
            jax.ShapeDtypeStruct((pad_b, ROWS1, LANES), jnp.float32),
            jax.ShapeDtypeStruct((pad_b, LANES), jnp.float32),
        ),
        grid_spec=pltpu.PrefetchScalarGridSpec(
            num_scalar_prefetch=0,
            grid=(n_tiles,),
            in_specs=[
                pl.BlockSpec((tb, 1, 1), lambda i: (i, 0, 0)),          # t1
                pl.BlockSpec((tb, 1), lambda i: (i, 0)),                # t2
                pl.BlockSpec((tb, ROWS1, LANES), lambda i: (i, 0, 0)),  # y1
                pl.BlockSpec((tb, LANES), lambda i: (i, 0)),            # y2
                pl.BlockSpec((ROWS1, LANES), lambda i: (0, 0)),         # W1 (resident)
                pl.BlockSpec((LANES, LANES), lambda i: (0, 0)),         # A2^T (resident)
                pl.BlockSpec((1, LANES), lambda i: (0, 0)),             # b2 (resident)
            ],
            out_specs=[
                pl.BlockSpec((tb, ROWS1, LANES), lambda i: (i, 0, 0)),
                pl.BlockSpec((tb, LANES), lambda i: (i, 0)),
            ],
        ),
        compiler_params=pltpu.CompilerParams(
            dimension_semantics=("parallel",),        # shards across v7x's 2 TCs
            vmem_limit_bytes=32 * 1024 * 1024,        # explicit; fits v7x's 64 MiB
        ),
        cost_estimate=cost,
    )(t1, t2, y1, y2, w1_2d, a2_t, b2_2d)

    out = jnp.concatenate([o1.reshape(pad_b, N1), o2], axis=-1)
    return out[:B]


@jax.jit
def tuple_func_forward(t, y, w1_2d, a2_t, b2_2d):
    """Drop-in _TupleFunc.forward(t, y): y is the flat (N,) state."""
    return tuple_func_forward_batch(
        jnp.reshape(jnp.asarray(t, jnp.float32), (1,)),
        jnp.reshape(y, (1, N)),
        w1_2d, a2_t, b2_2d,
    )[0]


def _reference(t, y, w1, a2, b2):
    # Pure-JAX reference reproducing _TupleFunc semantics with the same base_func.
    y1 = y[:N1].reshape(SHAPES[0])
    y2 = y[N1:].reshape(SHAPES[1])
    f1 = jnp.tanh(y1 * w1.reshape(SHAPES[0]) + t)
    f2 = jnp.tanh(a2 @ y2 + t * b2)
    return jnp.concatenate([f1.reshape(-1), f2.reshape(-1)])


if __name__ == "__main__":
    key = jax.random.PRNGKey(0)
    k_y, k_w1, k_a2, k_b2 = jax.random.split(key, 4)

    B = 2
    ys = jax.random.normal(k_y, (B, N), dtype=jnp.float32)
    w1 = jax.random.normal(k_w1, (N1,), dtype=jnp.float32) * 0.1
    a2 = jax.random.normal(k_a2, (N2, N2), dtype=jnp.float32) * (1.0 / N2 ** 0.5)
    b2 = jax.random.normal(k_b2, (N2,), dtype=jnp.float32) * 0.1
    ts = jnp.array([0.25, 0.75], dtype=jnp.float32)

    params = prepare_params(w1, a2, b2)

    out = jax.block_until_ready(tuple_func_forward_batch(ts, ys, *params))
    assert out.shape == (B, N)

    # Tight check: kernel vs pure-JAX reference using the SAME bf16-quantized
    # weights -> verifies the Pallas kernel itself.
    w1_q = params[0].astype(jnp.float32).reshape(N1)
    a2_q = params[1].astype(jnp.float32).T
    b2_q = params[2].astype(jnp.float32).reshape(N2)
    for b in range(B):
        ref_q = _reference(ts[b], ys[b], w1_q, a2_q, b2_q)
        assert jnp.allclose(out[b], ref_q, rtol=1e-3, atol=1e-3), "kernel mismatch"

    # Loose check vs the full-f32 reference (only bf16 weight quantization differs).
    for b in range(B):
        ref = _reference(ts[b], ys[b], w1, a2, b2)
        assert jnp.allclose(out[b], ref, rtol=2e-2, atol=2e-2), "quantized mismatch"

    # Single-evaluation drop-in path (module signature: forward(t, y)).
    out0 = jax.block_until_ready(tuple_func_forward(ts[0], ys[0], *params))
    assert jnp.allclose(out0, out[0], rtol=1e-6, atol=1e-6)

    # TODO(synk): _TupleFunc's base_func is user-supplied at construction; a
    # deterministic elementwise+linear base_func was synthesized for this kernel.
    print("KERNEL_OK")
</pallas_src>

<mosaic_0001>
module attributes {stable_mosaic.version = 11 : i64} {
  func.func @_tuple_func_kernel(%arg0: i32, %arg1: memref<8x1x1xf32, #tpu.memory_space<vmem>>, %arg2: memref<8x1xf32, #tpu.memory_space<vmem>>, %arg3: memref<8x8x128xf32, #tpu.memory_space<vmem>>, %arg4: memref<8x128xf32, #tpu.memory_space<vmem>>, %arg5: memref<8x128xbf16, #tpu.memory_space<vmem>>, %arg6: memref<128x128xbf16, #tpu.memory_space<vmem>>, %arg7: memref<1x128xf32, #tpu.memory_space<vmem>>, %arg8: memref<8x8x128xf32, #tpu.memory_space<vmem>>, %arg9: memref<8x128xf32, #tpu.memory_space<vmem>>) attributes {dimension_semantics = [#tpu.dimension_semantics<parallel>], iteration_bounds = array<i64: 1>, scalar_prefetch = 0 : i64, scratch_operands = 0 : i64, tpu.core_type = #tpu.core_type<tc>, window_params = [{transform_indices = @transform_0, window_bounds = array<i64: 8, 1, 1>}, {transform_indices = @transform_1, window_bounds = array<i64: 8, 1>}, {transform_indices = @transform_2, window_bounds = array<i64: 8, 8, 128>}, {transform_indices = @transform_3, window_bounds = array<i64: 8, 128>}, {pipeline_mode = #tpu.pipeline_mode<synchronous>, transform_indices = @transform_4, window_bounds = array<i64: 8, 128>}, {pipeline_mode = #tpu.pipeline_mode<synchronous>, transform_indices = @transform_5, window_bounds = array<i64: 128, 128>}, {pipeline_mode = #tpu.pipeline_mode<synchronous>, transform_indices = @transform_6, window_bounds = array<i64: 1, 128>}, {transform_indices = @transform_7, window_bounds = array<i64: 8, 8, 128>}, {transform_indices = @transform_8, window_bounds = array<i64: 8, 128>}]} {
    %c0 = arith.constant 0 : index
    %c0_0 = arith.constant 0 : index
    %0 = vector.load %arg5[%c0, %c0_0] : memref<8x128xbf16, #tpu.memory_space<vmem>>, vector<8x128xbf16>
    %1 = arith.extf %0 : vector<8x128xbf16> to vector<8x128xf32>
    %c0_1 = arith.constant 0 : index
    %c0_2 = arith.constant 0 : index
    %c0_3 = arith.constant 0 : index
    %2 = vector.load %arg3[%c0_1, %c0_2, %c0_3] : memref<8x8x128xf32, #tpu.memory_space<vmem>>, vector<8x8x128xf32>
    %3 = vector.shape_cast %1 : vector<8x128xf32> to vector<1x8x128xf32>
    %4 = vector.broadcast %3 : vector<1x8x128xf32> to vector<8x8x128xf32>
    %5 = arith.mulf %2, %4 : vector<8x8x128xf32>
    %c0_4 = arith.constant 0 : index
    %c0_5 = arith.constant 0 : index
    %c0_6 = arith.constant 0 : index
    %6 = vector.load %arg1[%c0_4, %c0_5, %c0_6] : memref<8x1x1xf32, #tpu.memory_space<vmem>>, vector<8x1x1xf32>
    %7 = vector.broadcast %6 : vector<8x1x1xf32> to vector<8x8x128xf32>
    %8 = arith.addf %5, %7 : vector<8x8x128xf32>
    %9 = math.tanh %8 : vector<8x8x128xf32>
    %c0_7 = arith.constant 0 : index
    %c0_8 = arith.constant 0 : index
    %c0_9 = arith.constant 0 : index
    %10 = vector.load %arg8[%c0_7, %c0_8, %c0_9] : memref<8x8x128xf32, #tpu.memory_space<vmem>>, vector<8x8x128xf32>
    tpu.vector_store %arg8[%c0_7, %c0_8, %c0_9], %9 {strides = array<i32>} : memref<8x8x128xf32, #tpu.memory_space<vmem>>, vector<8x8x128xf32>,
    %c0_10 = arith.constant 0 : index
    %c0_11 = arith.constant 0 : index
    %11 = vector.load %arg6[%c0_10, %c0_11] : memref<128x128xbf16, #tpu.memory_space<vmem>>, vector<128x128xbf16>
    %12 = arith.extf %11 : vector<128x128xbf16> to vector<128x128xf32>
    %c0_12 = arith.constant 0 : index
    %c0_13 = arith.constant 0 : index
    %13 = vector.load %arg4[%c0_12, %c0_13] : memref<8x128xf32, #tpu.memory_space<vmem>>, vector<8x128xf32>
    %cst = arith.constant dense<0.000000e+00> : vector<8x128xf32>
    %14 = tpu.matmul %13, %12, %cst {dimension_numbers = #tpu.dot_dimension_numbers<[1], [0], [0], [1], [0, 0, 1, 1], [], []>} : vector<8x128xf32>, vector<128x128xf32>, vector<8x128xf32> -> vector<8x128xf32>
    %c0_14 = arith.constant 0 : index
    %c0_15 = arith.constant 0 : index
    %15 = vector.load %arg2[%c0_14, %c0_15] : memref<8x1xf32, #tpu.memory_space<vmem>>, vector<8x1xf32>
    %c0_16 = arith.constant 0 : index
    %c0_17 = arith.constant 0 : index
    %16 = vector.load %arg7[%c0_16, %c0_17] : memref<1x128xf32, #tpu.memory_space<vmem>>, vector<1x128xf32>
    %17 = vector.broadcast %15 : vector<8x1xf32> to vector<8x128xf32>
    %18 = vector.broadcast %16 : vector<1x128xf32> to vector<8x128xf32>
    %19 = arith.mulf %17, %18 : vector<8x128xf32>
    %20 = arith.addf %14, %19 : vector<8x128xf32>
    %21 = math.tanh %20 : vector<8x128xf32>
    %c0_18 = arith.constant 0 : index
    %c0_19 = arith.constant 0 : index
    %22 = vector.load %arg9[%c0_18, %c0_19] : memref<8x128xf32, #tpu.memory_space<vmem>>, vector<8x128xf32>
    tpu.vector_store %arg9[%c0_18, %c0_19], %21 {strides = array<i32>} : memref<8x128xf32, #tpu.memory_space<vmem>>, vector<8x128xf32>,
    return
  }
  func.func @transform_0(%arg0: i32) -> (i32, i32, i32) {
    %c0_i32 = arith.constant 0 : i32
    %c0_i32_0 = arith.constant 0 : i32
    %c0_i32_1 = arith.constant 0 : i32
    return %arg0, %c0_i32, %c0_i32_0 : i32, i32, i32
  }
  func.func @transform_1(%arg0: i32) -> (i32, i32) {
    %c0_i32 = arith.constant 0 : i32
    %c0_i32_0 = arith.constant 0 : i32
    return %arg0, %c0_i32 : i32, i32
  }
  func.func @transform_2(%arg0: i32) -> (i32, i32, i32) {
    %c0_i32 = arith.constant 0 : i32
    %c0_i32_0 = arith.constant 0 : i32
    %c0_i32_1 = arith.constant 0 : i32
    return %arg0, %c0_i32, %c0_i32_0 : i32, i32, i32
  }
  func.func @transform_3(%arg0: i32) -> (i32, i32) {
    %c0_i32 = arith.constant 0 : i32
    %c0_i32_0 = arith.constant 0 : i32
    return %arg0, %c0_i32 : i32, i32
  }
  func.func @transform_4(%arg0: i32) -> (i32, i32) {
    %c0_i32 = arith.constant 0 : i32
    %c0_i32_0 = arith.constant 0 : i32
    %c0_i32_1 = arith.constant 0 : i32
    return %c0_i32, %c0_i32_0 : i32, i32
  }
  func.func @transform_5(%arg0: i32) -> (i32, i32) {
    %c0_i32 = arith.constant 0 : i32
    %c0_i32_0 = arith.constant 0 : i32
    %c0_i32_1 = arith.constant 0 : i32
    return %c0_i32, %c0_i32_0 : i32, i32
  }
  func.func @transform_6(%arg0: i32) -> (i32, i32) {
    %c0_i32 = arith.constant 0 : i32
    %c0_i32_0 = arith.constant 0 : i32
    %c0_i32_1 = arith.constant 0 : i32
    return %c0_i32, %c0_i32_0 : i32, i32
  }
  func.func @transform_7(%arg0: i32) -> (i32, i32, i32) {
    %c0_i32 = arith.constant 0 : i32
    %c0_i32_0 = arith.constant 0 : i32
    %c0_i32_1 = arith.constant 0 : i32
    return %arg0, %c0_i32, %c0_i32_0 : i32, i32, i32
  }
  func.func @transform_8(%arg0: i32) -> (i32, i32) {
    %c0_i32 = arith.constant 0 : i32
    %c0_i32_0 = arith.constant 0 : i32
    return %arg0, %c0_i32 : i32, i32
  }
}

</mosaic_0001>

<llo_original>
// kernel: tuple_func_forward_batch.1
$region0: #{tuple_func_forward_batch.1}
  #allocation0 [shape = 'u32[]', space=smem, size = 0x4, offset = 0x4, fixed_abs, tag = 'smem constant byte address 0x4 - core index']
  #allocation1 [shape = 'u32[144,128]{1,0:T(1,128)}', space=vmem, size = 0x12000, scoped, tag = 'internal scratch']
  %s0 = inlined_call_operand.vmem [shape: f32[8,1,1], index: 0, kind: input, shape index: {}]
  %s1 = inlined_call_operand.vmem [shape: f32[8,1], index: 1, kind: input, shape index: {}]
  %s2 = inlined_call_operand.vmem [shape: f32[8,8,128], index: 2, kind: input, shape index: {}]
  %s3 = inlined_call_operand.vmem [shape: f32[8,128], index: 3, kind: input, shape index: {}]
  %s4 = inlined_call_operand.vmem [shape: bf16[8,128], index: 4, kind: input, shape index: {}]
  %s5 = inlined_call_operand.vmem [shape: bf16[128,128], index: 5, kind: input, shape index: {}]
  %s6 = inlined_call_operand.vmem [shape: f32[1,128], index: 6, kind: input, shape index: {}]
  %s7 = inlined_call_operand.vmem [shape: f32[8,8,128], index: 7, kind: output, shape index: {0}]
  %s8 = inlined_call_operand.vmem [shape: f32[8,128], index: 8, kind: output, shape index: {1}]
  %9 = xla_tuple %s7, %s8
  %s10 = sld [smem:[#allocation0]]
  $region46: #{tuple_func_forward_batch.1} parent=0
    _
  %s12 = ssub.s32 1, %s10
  %s13 = scalar_select 0, %s12, %s10
  // Predicated region
  $region2: #{tuple_func_forward_batch.1} parent=0 // pred_check
    _
  $region3: #{tuple_func_forward_batch.1} parent=0 // pred_check_branch
    %15 = sbr.rel (0) target = $region5
  $region4: #{tuple_func_forward_batch.1} parent=0 // pred_region
    _
  $region5: #{tuple_func_forward_batch.1} parent=0 // pred_fallthru
    _
  // Predicated region
  $region6: #{tuple_func_forward_batch.1} parent=0 // pred_check
    _
  $region7: #{tuple_func_forward_batch.1} parent=0 // pred_check_branch
    %17 = sbr.rel (0) target = $region9
  $region8: #{tuple_func_forward_batch.1} parent=0 // pred_region
    _
  $region9: #{tuple_func_forward_batch.1} parent=0 // pred_fallthru
    _
  // Predicated region
  $region10: #{tuple_func_forward_batch.1} parent=0 // pred_check
    _
  $region11: #{tuple_func_forward_batch.1} parent=0 // pred_check_branch
    %19 = sbr.rel (0) target = $region13
  $region12: #{tuple_func_forward_batch.1} parent=0 // pred_region
    _
  $region13: #{tuple_func_forward_batch.1} parent=0 // pred_fallthru
    _
  // Predicated region
  $region14: #{tuple_func_forward_batch.1} parent=0 // pred_check
    _
  $region15: #{tuple_func_forward_batch.1} parent=0 // pred_check_branch
    %21 = sbr.rel (0) target = $region17
  $region16: #{tuple_func_forward_batch.1} parent=0 // pred_region
    _
  $region17: #{tuple_func_forward_batch.1} parent=0 // pred_fallthru
    _
  // Predicated region
  $region18: #{tuple_func_forward_batch.1} parent=0 // pred_check
    _
  $region19: #{tuple_func_forward_batch.1} parent=0 // pred_check_branch
    %23 = sbr.rel (0) target = $region21
  $region20: #{tuple_func_forward_batch.1} parent=0 // pred_region
    _
  $region21: #{tuple_func_forward_batch.1} parent=0 // pred_fallthru
    _
  // Predicated region
  $region22: #{tuple_func_forward_batch.1} parent=0 // pred_check
    _
  $region23: #{tuple_func_forward_batch.1} parent=0 // pred_check_branch
    %25 = sbr.rel (0) target = $region25
  $region24: #{tuple_func_forward_batch.1} parent=0 // pred_region
    _
  $region25: #{tuple_func_forward_batch.1} parent=0 // pred_fallthru
    _
  // Predicated region
  $region26: #{tuple_func_forward_batch.1} parent=0 // pred_check
    _
  $region27: #{tuple_func_forward_batch.1} parent=0 // pred_check_branch
    %27 = sbr.rel (0) target = $region29
  $region28: #{tuple_func_forward_batch.1} parent=0 // pred_region
    _
  $region29: #{tuple_func_forward_batch.1} parent=0 // pred_fallthru
    _
  %v28 = vld [vmem:[%s4] sm:$0xf]
  %v29 = vunpack.c.l.bf16 %v28
  %v30 = vld [vmem:[%s2] sm:$0xff]
  %v31 = vld [vmem:[%s2 + $0x8] sm:$0xff]
  %v32 = vld [vmem:[%s2 + $0x10] sm:$0xff]
  %v33 = vld [vmem:[%s2 + $0x18] sm:$0xff]
  %v34 = vld [vmem:[%s2 + $0x20] sm:$0xff]
  %v35 = vld [vmem:[%s2 + $0x28] sm:$0xff]
  %v36 = vld [vmem:[%s2 + $0x30] sm:$0xff]
  %v37 = vld [vmem:[%s2 + $0x38] sm:$0xff]
  %v38 = vmul.f32 %v30, %v29
  %v39 = vmul.f32 %v31, %v29
  %v40 = vmul.f32 %v32, %v29
  %v41 = vmul.f32 %v33, %v29
  %v42 = vmul.f32 %v34, %v29
  %v43 = vmul.f32 %v35, %v29
  %v44 = vmul.f32 %v36, %v29
  %v45 = vmul.f32 %v37, %v29
  %v46 = vld [vmem:[%s0] sm:$0x1]
  %v47 = vld [vmem:[%s0 + $0x1] sm:$0x1]
  %v48 = vld [vmem:[%s0 + $0x2] sm:$0x1]
  %v49 = vld [vmem:[%s0 + $0x3] sm:$0x1]
  %v50 = vld [vmem:[%s0 + $0x4] sm:$0x1]
  %v51 = vld [vmem:[%s0 + $0x5] sm:$0x1]
  %v52 = vld [vmem:[%s0 + $0x6] sm:$0x1]
  %v53 = vld [vmem:[%s0 + $0x7] sm:$0x1]
  %v62 = vlaneseq
  %v63 = vshrl.u32 %v62, 7
  %v64 = vsub.s32 0, %v63
  %v65 = vrot.slane %v46, %v64
  %v66 = vlaneseq
  %v67 = vshrl.u32 %v66, 7
  %v68 = vsub.s32 0, %v67
  %v69 = vrot.slane %v47, %v68
  %v70 = vlaneseq
  %v71 = vshrl.u32 %v70, 7
  %v72 = vsub.s32 0, %v71
  %v73 = vrot.slane %v48, %v72
  %v74 = vlaneseq
  %v75 = vshrl.u32 %v74, 7
  %v76 = vsub.s32 0, %v75
  %v77 = vrot.slane %v49, %v76
  %v78 = vlaneseq
  %v79 = vshrl.u32 %v78, 7
  %v80 = vsub.s32 0, %v79
  %v81 = vrot.slane %v50, %v80
  %v82 = vlaneseq
  %v83 = vshrl.u32 %v82, 7
  %v84 = vsub.s32 0, %v83
  %v85 = vrot.slane %v51, %v84
  %v86 = vlaneseq
  %v87 = vshrl.u32 %v86, 7
  %v88 = vsub.s32 0, %v87
  %v89 = vrot.slane %v52, %v88
  %v90 = vlaneseq
  %v91 = vshrl.u32 %v90, 7
  %v92 = vsub.s32 0, %v91
  %v93 = vrot.slane %v53, %v92
  %94 = vset.pattern.permute.xlu0 0
  %95 = vperm.xlu0 %94, %v65
  %v96 = vpop.permute.xlu0 %95
  %98 = vset.pattern.permute.xlu0 0
  %99 = vperm.xlu0 %98, %v69
  %v100 = vpop.permute.xlu0 %99
  %102 = vset.pattern.permute.xlu0 0
  %103 = vperm.xlu0 %102, %v73
  %v104 = vpop.permute.xlu0 %103
  %106 = vset.pattern.permute.xlu0 0
  %107 = vperm.xlu0 %106, %v77
  %v108 = vpop.permute.xlu0 %107
  %110 = vset.pattern.permute.xlu0 0
  %111 = vperm.xlu0 %110, %v81
  %v112 = vpop.permute.xlu0 %111
  %114 = vset.pattern.permute.xlu0 0
  %115 = vperm.xlu0 %114, %v85
  %v116 = vpop.permute.xlu0 %115
  %118 = vset.pattern.permute.xlu0 0
  %119 = vperm.xlu0 %118, %v89
  %v120 = vpop.permute.xlu0 %119
  %122 = vset.pattern.permute.xlu0 0
  %123 = vperm.xlu0 %122, %v93
  %v124 = vpop.permute.xlu0 %123
  %v126 = vadd.f32 %v38, %v96
  %v127 = vadd.f32 %v39, %v100
  %v128 = vadd.f32 %v40, %v104
  %v129 = vadd.f32 %v41, %v108
  %v130 = vadd.f32 %v42, %v112
  %v131 = vadd.f32 %v43, %v116
  %v132 = vadd.f32 %v44, %v120
  %v133 = vadd.f32 %v45, %v124
  %v134 = vtanh.pop %v126
  %v135 = vtanh.pop %v127
  %v136 = vtanh.pop %v128
  %v137 = vtanh.pop %v129
  %v138 = vtanh.pop %v130
  %v139 = vtanh.pop %v131
  %v140 = vtanh.pop %v132
  %v141 = vtanh.pop %v133
  %142 = vst [vmem:[%s7] sm:$0xff] %v134
  %143 = vst [vmem:[%s7 + $0x8] sm:$0xff] %v135
  %144 = vst [vmem:[%s7 + $0x10] sm:$0xff] %v136
  %145 = vst [vmem:[%s7 + $0x18] sm:$0xff] %v137
  %146 = vst [vmem:[%s7 + $0x20] sm:$0xff] %v138
  %147 = vst [vmem:[%s7 + $0x28] sm:$0xff] %v139
  %148 = vst [vmem:[%s7 + $0x30] sm:$0xff] %v140
  %149 = vst [vmem:[%s7 + $0x38] sm:$0xff] %v141
  %v150 = vld [vmem:[%s5] sm:$0xf]
  %v151 = vld [vmem:[%s5 + $0x4] sm:$0xf]
  %v152 = vld [vmem:[%s5 + $0x8] sm:$0xf]
  %v153 = vld [vmem:[%s5 + $0xc] sm:$0xf]
  %v154 = vld [vmem:[%s5 + $0x10] sm:$0xf]
  %v155 = vld [vmem:[%s5 + $0x14] sm:$0xf]
  %v156 = vld [vmem:[%s5 + $0x18] sm:$0xf]
  %v157 = vld [vmem:[%s5 + $0x1c] sm:$0xf]
  %v158 = vld [vmem:[%s5 + $0x20] sm:$0xf]
  %v159 = vld [vmem:[%s5 + $0x24] sm:$0xf]
  %v160 = vld [vmem:[%s5 + $0x28] sm:$0xf]
  %v161 = vld [vmem:[%s5 + $0x2c] sm:$0xf]
  %v162 = vld [vmem:[%s5 + $0x30] sm:$0xf]
  %v163 = vld [vmem:[%s5 + $0x34] sm:$0xf]
  %v164 = vld [vmem:[%s5 + $0x38] sm:$0xf]
  %v165 = vld [vmem:[%s5 + $0x3c] sm:$0xf]
  %v166 = vunpack.c.l.bf16 %v150
  %v167 = vunpack.c.l.bf16 %v151
  %v168 = vunpack.c.l.bf16 %v152
  %v169 = vunpack.c.l.bf16 %v153
  %v170 = vunpack.c.l.bf16 %v154
  %v171 = vunpack.c.l.bf16 %v155
  %v172 = vunpack.c.l.bf16 %v156
  %v173 = vunpack.c.l.bf16 %v157
  %v174 = vunpack.c.l.bf16 %v158
  %v175 = vunpack.c.l.bf16 %v159
  %v176 = vunpack.c.l.bf16 %v160
  %v177 = vunpack.c.l.bf16 %v161
  %v178 = vunpack.c.l.bf16 %v162
  %v179 = vunpack.c.l.bf16 %v163
  %v180 = vunpack.c.l.bf16 %v164
  %v181 = vunpack.c.l.bf16 %v165
  %v182 = vld [vmem:[%s3] sm:$0xff]
  %v183 = vld [vmem:[%s1] sm:$0xff]
  %v184 = vld [vmem:[%s6] sm:$0x1]
  %186 = vset.pattern.permute.xlu0 0
  %187 = vperm.xlu0 %186, %v183
  %v188 = vpop.permute.xlu0 %187
  %v191 = vlaneseq
  %v192 = vshrl.u32 %v191, 7
  %v193 = vsub.s32 0, %v192
  %v194 = vrot.slane %v184, %v193
  %v196 = vmul.f32 %v188, %v194
  %197 = vmatprep.subr.mxu0 0.0
  %198 = vmatpush1.msra.mxu0 %v166
  %199 = vmatprep.subr.mxu0 0.0
  %200 = vmatpush1.msra.mxu0 %v167
  %201 = vmatprep.subr.mxu0 0.0
  %202 = vmatpush1.msra.mxu0 %v168
  %203 = vmatprep.subr.mxu0 0.0
  %204 = vmatpush1.msra.mxu0 %v169
  %205 = vmatprep.subr.mxu0 0.0
  %206 = vmatpush1.msra.mxu0 %v170
  %207 = vmatprep.subr.mxu0 0.0
  %208 = vmatpush1.msra.mxu0 %v171
  %209 = vmatprep.subr.mxu0 0.0
  %210 = vmatpush1.msra.mxu0 %v172
  %211 = vmatprep.subr.mxu0 0.0
  %212 = vmatpush1.msra.mxu0 %v173
  %213 = vmatprep.subr.mxu0 0.0
  %214 = vmatpush1.msra.mxu0 %v174
  %215 = vmatprep.subr.mxu0 0.0
  %216 = vmatpush1.msra.mxu0 %v175
  %217 = vmatprep.subr.mxu0 0.0
  %218 = vmatpush1.msra.mxu0 %v176
  %219 = vmatprep.subr.mxu0 0.0
  %220 = vmatpush1.msra.mxu0 %v177
  %221 = vmatprep.subr.mxu0 0.0
  %222 = vmatpush1.msra.mxu0 %v178
  %223 = vmatprep.subr.mxu0 0.0
  %224 = vmatpush1.msra.mxu0 %v179
  %225 = vmatprep.subr.mxu0 0.0
  %226 = vmatpush1.msra.mxu0 %v180
  %227 = vmatprep.subr.mxu0 0.0
  %228 = vmatpush1.msra.mxu0 %v181
  %229 = vmatprep.subr.mxu0 0.0
  %230 = vmatpush1.msra.mxu0 0.0
  %231 = vmatprep.subr.mxu0 0.0
  %232 = vmatpush1.msra.mxu0 0.0
  %233 = vmatprep.subr.mxu0 0.0
  %234 = vmatpush1.msra.mxu0 0.0
  %235 = vmatprep.subr.mxu0 0.0
  %236 = vmatpush1.msra.mxu0 0.0
  %237 = vmatprep.subr.mxu0 0.0
  %238 = vmatpush1.msra.mxu0 0.0
  %239 = vmatprep.subr.mxu0 0.0
  %240 = vmatpush1.msra.mxu0 0.0
  %241 = vmatprep.subr.mxu0 0.0
  %242 = vmatpush1.msra.mxu0 0.0
  %243 = vmatprep.subr.mxu0 0.0
  %244 = vmatpush1.msra.mxu0 0.0
  %245 = vmatprep.subr.mxu0 0.0
  %246 = vmatpush1.msra.mxu0 0.0
  %247 = vmatprep.subr.mxu0 0.0
  %248 = vmatpush1.msra.mxu0 0.0
  %249 = vmatprep.subr.mxu0 0.0
  %250 = vmatpush1.msra.mxu0 0.0
  %251 = vmatprep.subr.mxu0 0.0
  %252 = vmatpush1.msra.mxu0 0.0
  %253 = vmatprep.subr.mxu0 0.0
  %254 = vmatpush1.msra.mxu0 0.0
  %255 = vmatprep.subr.mxu0 0.0
  %256 = vmatpush1.msra.mxu0 0.0
  %257 = vmatprep.subr.mxu0 0.0
  %258 = vmatpush1.msra.mxu0 0.0
  %259 = vmatprep.subr.mxu0 0.0
  %260 = vmatpush1.msra.mxu0 0.0
  %261 = vmatprep.mubr.f32.mxu0 0.0
  %262 = vmatmul.mubr.f32.gmra.mrb[0].mxu0 %v182
  %v263 = vpop.f32.mrb[0].mxu0
  %v264 = vadd.f32 %v196, %v263
  %v265 = vpop.f32.mrb[0].mxu0
  %266 = vdwg.mxu0
  %v267 = vtanh.pop %v264
  %268 = vst [vmem:[%s8] sm:$0xff] %v267
  // Predicated region
  $region30: #{tuple_func_forward_batch.1} parent=0 // pred_check
    _
  $region31: #{tuple_func_forward_batch.1} parent=0 // pred_check_branch
    %270 = sbr.rel (0) target = $region33
  $region32: #{tuple_func_forward_batch.1} parent=0 // pred_region
    _
  $region33: #{tuple_func_forward_batch.1} parent=0 // pred_fallthru
    _
  // Predicated region
  $region34: #{tuple_func_forward_batch.1} parent=0 // pred_check
    _
  $region35: #{tuple_func_forward_batch.1} parent=0 // pred_check_branch
    %272 = sbr.rel (0) target = $region37
  $region36: #{tuple_func_forward_batch.1} parent=0 // pred_region
    _
  $region37: #{tuple_func_forward_batch.1} parent=0 // pred_fallthru
    _
  // Predicated region
  $region38: #{tuple_func_forward_batch.1} parent=0 // pred_check
    _
  $region39: #{tuple_func_forward_batch.1} parent=0 // pred_check_branch
    %274 = sbr.rel (0) target = $region41
  $region40: #{tuple_func_forward_batch.1} parent=0 // pred_region
    _
  $region41: #{tuple_func_forward_batch.1} parent=0 // pred_fallthru
    _
  // Predicated region
  $region42: #{tuple_func_forward_batch.1} parent=0 // pred_check
    _
  $region43: #{tuple_func_forward_batch.1} parent=0 // pred_check_branch
    %276 = sbr.rel (0) target = $region45
  $region44: #{tuple_func_forward_batch.1} parent=0 // pred_region
    _
  $region45: #{tuple_func_forward_batch.1} parent=0 // pred_fallthru
    _

</llo_original>
